<compile_context>
chip_gen: v5e
topology: v5e:2x2
jax: 0.10.0
libtpu: 0.0.40
codegen_flags: <defaults>
</compile_context>

<pallas_src>
import functools

import jax
import jax.numpy as jnp
from jax.experimental import pallas as pl
from jax.experimental.pallas import tpu as pltpu

BN_EPS = 1e-5


# ---------------------------------------------------------------------------
# Kernel bodies
# ---------------------------------------------------------------------------

def _finalize_fc(sum_ref, sq_ref, w1_ref, b1_ref, o_ref, T):
    """mean/std from running sums, split matmul fc1, write output block."""
    H = sum_ref.shape[-1]
    s = sum_ref[...]
    mean = s * (1.0 / T)
    # torch.std default is the unbiased estimator (divide by T-1).
    # Single-pass form; clamp at 0 for numerical safety before sqrt.
    var = jnp.maximum((sq_ref[...] - s * mean) * (1.0 / (T - 1)), 0.0)
    std = jnp.sqrt(var)
    o_ref[...] = (
        jnp.dot(mean, w1_ref[:H, :], preferred_element_type=jnp.float32)
        + jnp.dot(std, w1_ref[H:, :], preferred_element_type=jnp.float32)
        + b1_ref[...])


def _kernel_last_layer(x_ref, w1_ref, b1_ref, o_ref, sum_ref, sq_ref,
                       *, T, T_TILE, needs_mask):
    """Grid = (batch_tiles, time_tiles).  x block: (B_TILE, T_TILE, H)."""
    t = pl.program_id(1)

    @pl.when(t == 0)
    def _init():
        sum_ref[...] = jnp.zeros_like(sum_ref)
        sq_ref[...] = jnp.zeros_like(sq_ref)

    xt = x_ref[...].astype(jnp.float32)            # (B_TILE, T_TILE, H)
    if needs_mask:
        row = jax.lax.broadcasted_iota(jnp.int32, xt.shape, 1)
        xt = jnp.where(t * T_TILE + row < T, xt, 0.0)
    sum_ref[...] += jnp.sum(xt, axis=1)
    sq_ref[...] += jnp.sum(xt * xt, axis=1)

    @pl.when(t == pl.num_programs(1) - 1)
    def _finalize():
        _finalize_fc(sum_ref, sq_ref, w1_ref, b1_ref, o_ref, T)


def _kernel_weighted(x_ref, lw_ref, w1_ref, b1_ref, o_ref,
                     xw_ref, sum_ref, sq_ref,
                     *, T, T_TILE, needs_mask):
    """Grid = (batch_tiles, time_tiles, layers).  Layers stream one at a time."""
    t = pl.program_id(1)
    l = pl.program_id(2)
    n_t = pl.num_programs(1)
    n_l = pl.num_programs(2)

    @pl.when(jnp.logical_and(t == 0, l == 0))
    def _init():
        sum_ref[...] = jnp.zeros_like(sum_ref)
        sq_ref[...] = jnp.zeros_like(sq_ref)

    @pl.when(l == 0)
    def _init_tile():
        xw_ref[...] = jnp.zeros_like(xw_ref)

    # per-layer scalar weight read from SMEM, applied to the streamed tile
    xw_ref[...] += lw_ref[l] * x_ref[...].astype(jnp.float32)

    @pl.when(l == n_l - 1)
    def _fold():
        xw = xw_ref[...]
        if needs_mask:
            row = jax.lax.broadcasted_iota(jnp.int32, xw.shape, 1)
            xw = jnp.where(t * T_TILE + row < T, xw, 0.0)
        sum_ref[...] += jnp.sum(xw, axis=1)
        sq_ref[...] += jnp.sum(xw * xw, axis=1)

    @pl.when(jnp.logical_and(t == n_t - 1, l == n_l - 1))
    def _finalize():
        _finalize_fc(sum_ref, sq_ref, w1_ref, b1_ref, o_ref, T)


# ---------------------------------------------------------------------------
# Wrapper
# ---------------------------------------------------------------------------

def _choose_t_tile(b_tile, T, H, target_tile_bytes):
    """Largest multiple-of-8 time tile whose (B_TILE, T_TILE, H) f32 block
    stays under target_tile_bytes (generation-tunable: ~8 MiB is safe on
    v5e/v6e/v7x; v6e can take 16-32 MiB, v7x should stay <= ~12 MiB)."""
    if T <= 8:
        return T
    rows = max(8, target_tile_bytes // (b_tile * H * 4))
    if rows >= T:
        return T
    return max(8, (rows // 8) * 8)


def _vmem_limit_bytes(x_tile_bytes, n_x_buffers, b_tile, H, E):
    fixed = (2 * b_tile * H * 4            # sum / sumsq scratch
             + 2 * (2 * H * E + E) * 4     # fc1 weight + bias (double-buffered)
             + 2 * b_tile * E * 4)         # output block
    est = n_x_buffers * x_tile_bytes + fixed + (4 << 20)   # headroom
    return int(min(64 << 20, max(est, 16 << 20)))


def _batchnorm_train(y, gamma, beta):
    """BatchNorm1d training-mode semantics (batch statistics, biased var)."""
    mu = jnp.mean(y, axis=0, keepdims=True)
    var = jnp.mean(jnp.square(y - mu), axis=0, keepdims=True)
    return (y - mu) * jax.lax.rsqrt(var + BN_EPS) * gamma + beta


def linear_classifier_forward(x, params, *, weighted_sum=False,
                              t_tile=None, b_tile=None,
                              target_tile_bytes=8 * 1024 * 1024):
    """x: (B, L+1, T, H) (or (B, T, H)) -> (B, E) float32."""
    if x.ndim == 3:
        # PyTorch forward feeds 3-D activations straight to pooling.
        x = x[:, None, :, :]
    B, L1, T, H = x.shape
    assert T >= 2, "unbiased std over time needs T >= 2 (torch gives NaN at T=1)"

    w1 = params["fc1_w"].astype(jnp.float32)          # (2H, E)
    E = w1.shape[1]
    b1 = params["fc1_b"].reshape(1, E).astype(jnp.float32)
    gamma = params["bn1_gamma"].reshape(1, E)
    beta = params["bn1_beta"].reshape(1, E)

    B_TILE = B if b_tile is None else int(b_tile)
    assert B % B_TILE == 0 and (B_TILE == B or B_TILE % 8 == 0)
    T_TILE = (_choose_t_tile(B_TILE, T, H, target_tile_bytes)
              if t_tile is None else int(t_tile))
    assert T_TILE == T or T_TILE % 8 == 0
    num_t = pl.cdiv(T, T_TILE)
    needs_mask = (T % T_TILE) != 0

    out_shape = jax.ShapeDtypeStruct((B, E), jnp.float32)
    x_tile_bytes = B_TILE * T_TILE * H * 4
    itemsize = jnp.dtype(x.dtype).itemsize

    if weighted_sum:
        lw = params["w"].reshape(L1).astype(jnp.float32)   # per-layer scalars
        kernel = functools.partial(_kernel_weighted, T=T, T_TILE=T_TILE,
                                   needs_mask=needs_mask)
        grid = (B // B_TILE, num_t, L1)
        cost = pl.CostEstimate(
            flops=int(2 * B * L1 * T * H + 3 * B * T * H + 4 * B * H * E),
            transcendentals=int(B * H),
            bytes_accessed=int(B * L1 * T * H * itemsize
                               + (2 * H * E + E + L1 + B * E) * 4))
        y = pl.pallas_call(
            kernel,
            out_shape=out_shape,
            grid=grid,
            in_specs=[
                # one (B_TILE, layer=l, T_TILE, H) block per grid step
                pl.BlockSpec((B_TILE, None, T_TILE, H),
                             lambda b, t, l: (b, l, t, 0)),
                # per-layer scalar weights live in SMEM
                pl.BlockSpec(memory_space=pltpu.MemorySpace.SMEM),
                pl.BlockSpec((2 * H, E), lambda b, t, l: (0, 0)),
                pl.BlockSpec((1, E), lambda b, t, l: (0, 0)),
            ],
            out_specs=pl.BlockSpec((B_TILE, E), lambda b, t, l: (b, 0)),
            scratch_shapes=[
                pltpu.VMEM((B_TILE, T_TILE, H), jnp.float32),   # weighted tile
                pltpu.VMEM((B_TILE, H), jnp.float32),           # running sum
                pltpu.VMEM((B_TILE, H), jnp.float32),           # running sumsq
            ],
            compiler_params=pltpu.CompilerParams(
                dimension_semantics=("parallel", "arbitrary", "arbitrary"),
                vmem_limit_bytes=_vmem_limit_bytes(x_tile_bytes, 3, B_TILE, H, E)),
            cost_estimate=cost,
        )(x, lw, w1, b1)
    else:
        kernel = functools.partial(_kernel_last_layer, T=T, T_TILE=T_TILE,
                                   needs_mask=needs_mask)
        grid = (B // B_TILE, num_t)
        last = L1 - 1
        cost = pl.CostEstimate(
            flops=int(3 * B * T * H + 4 * B * H * E),
            transcendentals=int(B * H),
            bytes_accessed=int(B * T * H * itemsize + (2 * H * E + E + B * E) * 4))
        y = pl.pallas_call(
            kernel,
            out_shape=out_shape,
            grid=grid,
            in_specs=[
                # last-layer selection via index_map: no XLA slice / HBM copy
                pl.BlockSpec((B_TILE, None, T_TILE, H),
                             lambda b, t: (b, last, t, 0)),
                pl.BlockSpec((2 * H, E), lambda b, t: (0, 0)),
                pl.BlockSpec((1, E), lambda b, t: (0, 0)),
            ],
            out_specs=pl.BlockSpec((B_TILE, E), lambda b, t: (b, 0)),
            scratch_shapes=[
                pltpu.VMEM((B_TILE, H), jnp.float32),           # running sum
                pltpu.VMEM((B_TILE, H), jnp.float32),           # running sumsq
            ],
            compiler_params=pltpu.CompilerParams(
                dimension_semantics=("parallel", "arbitrary"),
                vmem_limit_bytes=_vmem_limit_bytes(x_tile_bytes, 2, B_TILE, H, E)),
            cost_estimate=cost,
        )(x, w1, b1)

    # Tiny O(B*E) batch-coupled epilogue kept in plain JAX so the kernel's
    # batch grid axis can be "parallel" (megacore / v7x two-TC friendly).
    return _batchnorm_train(y, gamma, beta)


# ---------------------------------------------------------------------------
# Pure-JAX reference + params
# ---------------------------------------------------------------------------

def reference_forward(x, params, *, weighted_sum=False):
    """Pure-JAX mirror of the PyTorch forward for validation."""
    if weighted_sum:
        w = params["w"]                                        # (L1, 1, 1)
        xr = (x * w[None]).sum(axis=1)                         # (B, T, H)
    else:
        xr = x[:, -1, :, :]
    xp = jnp.transpose(xr, (0, 2, 1))                          # (B, H, T)
    mean = xp.mean(axis=-1)
    std = jnp.std(xp, axis=-1, ddof=1)                         # torch.std: unbiased
    feat = jnp.concatenate([mean, std], axis=1)                # (B, 2H)
    y = feat @ params["fc1_w"] + params["fc1_b"]
    mu = y.mean(axis=0)
    var = y.var(axis=0)                                        # biased, like BN
    yh = (y - mu) / jnp.sqrt(var + BN_EPS)
    return yh * params["bn1_gamma"] + params["bn1_beta"]


def init_params(key, ssl_hidden_layer, ssl_hidden_size, embedding_size):
    k1, k2, k3 = jax.random.split(key, 3)
    H2 = 2 * ssl_hidden_size
    bound = 1.0 / jnp.sqrt(H2)
    params = {
        # stored pre-transposed: (2H, E)
        "fc1_w": jax.random.uniform(k1, (H2, embedding_size), jnp.float32,
                                    -bound, bound),
        "fc1_b": jax.random.uniform(k2, (embedding_size,), jnp.float32,
                                    -bound, bound),
        # BatchNorm1d defaults
        "bn1_gamma": jnp.ones((embedding_size,), jnp.float32),
        "bn1_beta": jnp.zeros((embedding_size,), jnp.float32),
        # weighted-sum layer weights: torch.rand(L+1, 1, 1)
        "w": jax.random.uniform(k3, (ssl_hidden_layer + 1, 1, 1), jnp.float32),
    }
    return params


if __name__ == "__main__":
    # Small shapes consistent with the module's forward.
    B, L, T, H, E = 2, 4, 8, 32, 16       # ssl_hidden_layer=4 -> L+1=5 layers

    key = jax.random.PRNGKey(0)
    kx, kp, kx2 = jax.random.split(key, 3)
    x = jax.random.normal(kx, (B, L + 1, T, H), jnp.float32)
    params = init_params(kp, L, H, E)

    # default path: weighted_sum=False (take last SSL layer via index_map)
    out = jax.block_until_ready(
        linear_classifier_forward(x, params, weighted_sum=False))
    ref = reference_forward(x, params, weighted_sum=False)
    assert out.shape == (B, E)
    assert jnp.allclose(out, ref, atol=1e-3, rtol=1e-3)

    # weighted_sum=True path (learned per-layer weights, layer-streaming grid)
    out_w = jax.block_until_ready(
        linear_classifier_forward(x, params, weighted_sum=True))
    ref_w = reference_forward(x, params, weighted_sum=True)
    assert jnp.allclose(out_w, ref_w, atol=1e-3, rtol=1e-3)

    # Exercise the multi-step T grid + ragged-tail masking (T=12, tile=8).
    T2 = 12
    x2 = jax.random.normal(kx2, (B, L + 1, T2, H), jnp.float32)
    out2 = jax.block_until_ready(
        linear_classifier_forward(x2, params, weighted_sum=False, t_tile=8))
    ref2 = reference_forward(x2, params, weighted_sum=False)
    assert jnp.allclose(out2, ref2, atol=1e-3, rtol=1e-3)

    out2w = jax.block_until_ready(
        linear_classifier_forward(x2, params, weighted_sum=True, t_tile=8))
    ref2w = reference_forward(x2, params, weighted_sum=True)
    assert jnp.allclose(out2w, ref2w, atol=1e-3, rtol=1e-3)

    print("KERNEL_OK")
</pallas_src>

<mosaic_0001>
module attributes {stable_mosaic.version = 11 : i64} {
  func.func @_kernel_last_layer(%arg0: i32, %arg1: i32, %arg2: memref<2x1x8x32xf32, #tpu.memory_space<vmem>>, %arg3: memref<64x16xf32, #tpu.memory_space<vmem>>, %arg4: memref<1x16xf32, #tpu.memory_space<vmem>>, %arg5: memref<2x16xf32, #tpu.memory_space<vmem>>, %arg6: memref<2x32xf32, #tpu.memory_space<vmem>>, %arg7: memref<2x32xf32, #tpu.memory_space<vmem>>) attributes {dimension_semantics = [#tpu.dimension_semantics<parallel>, #tpu.dimension_semantics<arbitrary>], iteration_bounds = array<i64: 1, 1>, scalar_prefetch = 0 : i64, scratch_operands = 2 : i64, tpu.core_type = #tpu.core_type<tc>, window_params = [{transform_indices = @transform_0, window_bounds = array<i64: 2, 1, 8, 32>}, {pipeline_mode = #tpu.pipeline_mode<synchronous>, transform_indices = @transform_1, window_bounds = array<i64: 64, 16>}, {pipeline_mode = #tpu.pipeline_mode<synchronous>, transform_indices = @transform_2, window_bounds = array<i64: 1, 16>}, {transform_indices = @transform_3, window_bounds = array<i64: 2, 16>}]} {
    %c0_i32 = arith.constant 0 : i32
    %0 = arith.cmpi eq, %arg1, %c0_i32 : i32
    %1 = arith.extui %0 : i1 to i32
    %c0_i32_0 = arith.constant 0 : i32
    %2 = arith.cmpi ne, %1, %c0_i32_0 : i32
    scf.if %2 {
      %cst_15 = arith.constant 0.000000e+00 : f32
      %17 = vector.broadcast %cst_15 : f32 to vector<2x32xf32>
      %c0_16 = arith.constant 0 : index
      %c0_17 = arith.constant 0 : index
      %18 = vector.load %arg6[%c0_16, %c0_17] : memref<2x32xf32, #tpu.memory_space<vmem>>, vector<2x32xf32>
      tpu.vector_store %arg6[%c0_16, %c0_17], %17 {strides = array<i32>} : memref<2x32xf32, #tpu.memory_space<vmem>>, vector<2x32xf32>,
      %cst_18 = arith.constant 0.000000e+00 : f32
      %19 = vector.broadcast %cst_18 : f32 to vector<2x32xf32>
      %c0_19 = arith.constant 0 : index
      %c0_20 = arith.constant 0 : index
      %20 = vector.load %arg7[%c0_19, %c0_20] : memref<2x32xf32, #tpu.memory_space<vmem>>, vector<2x32xf32>
      tpu.vector_store %arg7[%c0_19, %c0_20], %19 {strides = array<i32>} : memref<2x32xf32, #tpu.memory_space<vmem>>, vector<2x32xf32>,
    } else {
    }
    %c0 = arith.constant 0 : index
    %c0_1 = arith.constant 0 : index
    %c0_2 = arith.constant 0 : index
    %c0_3 = arith.constant 0 : index
    %3 = vector.load %arg2[%c0, %c0_1, %c0_2, %c0_3] : memref<2x1x8x32xf32, #tpu.memory_space<vmem>>, vector<2x1x8x32xf32>
    %4 = vector.shape_cast %3 : vector<2x1x8x32xf32> to vector<2x8x32xf32>
    %c0_4 = arith.constant 0 : index
    %c0_5 = arith.constant 0 : index
    %5 = vector.load %arg6[%c0_4, %c0_5] : memref<2x32xf32, #tpu.memory_space<vmem>>, vector<2x32xf32>
    %cst = arith.constant dense<0.000000e+00> : vector<2x32xf32>
    %6 = vector.multi_reduction <add>, %4, %cst [1] : vector<2x8x32xf32> to vector<2x32xf32>
    %7 = arith.addf %5, %6 : vector<2x32xf32>
    %c0_6 = arith.constant 0 : index
    %c0_7 = arith.constant 0 : index
    %8 = vector.load %arg6[%c0_6, %c0_7] : memref<2x32xf32, #tpu.memory_space<vmem>>, vector<2x32xf32>
    tpu.vector_store %arg6[%c0_6, %c0_7], %7 {strides = array<i32>} : memref<2x32xf32, #tpu.memory_space<vmem>>, vector<2x32xf32>,
    %c0_8 = arith.constant 0 : index
    %c0_9 = arith.constant 0 : index
    %9 = vector.load %arg7[%c0_8, %c0_9] : memref<2x32xf32, #tpu.memory_space<vmem>>, vector<2x32xf32>
    %10 = arith.mulf %4, %4 : vector<2x8x32xf32>
    %cst_10 = arith.constant dense<0.000000e+00> : vector<2x32xf32>
    %11 = vector.multi_reduction <add>, %10, %cst_10 [1] : vector<2x8x32xf32> to vector<2x32xf32>
    %12 = arith.addf %9, %11 : vector<2x32xf32>
    %c0_11 = arith.constant 0 : index
    %c0_12 = arith.constant 0 : index
    %13 = vector.load %arg7[%c0_11, %c0_12] : memref<2x32xf32, #tpu.memory_space<vmem>>, vector<2x32xf32>
    tpu.vector_store %arg7[%c0_11, %c0_12], %12 {strides = array<i32>} : memref<2x32xf32, #tpu.memory_space<vmem>>, vector<2x32xf32>,
    %c0_i32_13 = arith.constant 0 : i32
    %14 = arith.cmpi eq, %arg1, %c0_i32_13 : i32
    %15 = arith.extui %14 : i1 to i32
    %c0_i32_14 = arith.constant 0 : i32
    %16 = arith.cmpi ne, %15, %c0_i32_14 : i32
    scf.if %16 {
      %c0_15 = arith.constant 0 : index
      %c0_16 = arith.constant 0 : index
      %17 = vector.load %arg6[%c0_15, %c0_16] : memref<2x32xf32, #tpu.memory_space<vmem>>, vector<2x32xf32>
      %cst_17 = arith.constant 1.250000e-01 : f32
      %18 = vector.broadcast %cst_17 : f32 to vector<2x32xf32>
      %19 = arith.mulf %17, %18 : vector<2x32xf32>
      %c0_18 = arith.constant 0 : index
      %c0_19 = arith.constant 0 : index
      %20 = vector.load %arg7[%c0_18, %c0_19] : memref<2x32xf32, #tpu.memory_space<vmem>>, vector<2x32xf32>
      %21 = arith.mulf %17, %19 : vector<2x32xf32>
      %22 = arith.subf %20, %21 : vector<2x32xf32>
      %cst_20 = arith.constant 0.142857149 : f32
      %23 = vector.broadcast %cst_20 : f32 to vector<2x32xf32>
      %24 = arith.mulf %22, %23 : vector<2x32xf32>
      %cst_21 = arith.constant 0.000000e+00 : f32
      %25 = vector.broadcast %cst_21 : f32 to vector<2x32xf32>
      %26 = arith.maximumf %24, %25 : vector<2x32xf32>
      %27 = math.sqrt %26 : vector<2x32xf32>
      %c0_22 = arith.constant 0 : index
      %c0_23 = arith.constant 0 : index
      %28 = vector.load %arg3[%c0_22, %c0_23] : memref<64x16xf32, #tpu.memory_space<vmem>>, vector<32x16xf32>
      %cst_24 = arith.constant dense<0.000000e+00> : vector<2x16xf32>
      %29 = tpu.matmul %19, %28, %cst_24 {dimension_numbers = #tpu.dot_dimension_numbers<[1], [0], [0], [1], [0, 0, 1, 1], [], []>} : vector<2x32xf32>, vector<32x16xf32>, vector<2x16xf32> -> vector<2x16xf32>
      %c32 = arith.constant 32 : index
      %c0_25 = arith.constant 0 : index
      %30 = vector.load %arg3[%c32, %c0_25] : memref<64x16xf32, #tpu.memory_space<vmem>>, vector<32x16xf32>
      %cst_26 = arith.constant dense<0.000000e+00> : vector<2x16xf32>
      %31 = tpu.matmul %27, %30, %cst_26 {dimension_numbers = #tpu.dot_dimension_numbers<[1], [0], [0], [1], [0, 0, 1, 1], [], []>} : vector<2x32xf32>, vector<32x16xf32>, vector<2x16xf32> -> vector<2x16xf32>
      %32 = arith.addf %29, %31 : vector<2x16xf32>
      %c0_27 = arith.constant 0 : index
      %c0_28 = arith.constant 0 : index
      %33 = vector.load %arg4[%c0_27, %c0_28] : memref<1x16xf32, #tpu.memory_space<vmem>>, vector<1x16xf32>
      %34 = vector.broadcast %33 : vector<1x16xf32> to vector<2x16xf32>
      %35 = arith.addf %32, %34 : vector<2x16xf32>
      %c0_29 = arith.constant 0 : index
      %c0_30 = arith.constant 0 : index
      %36 = vector.load %arg5[%c0_29, %c0_30] : memref<2x16xf32, #tpu.memory_space<vmem>>, vector<2x16xf32>
      tpu.vector_store %arg5[%c0_29, %c0_30], %35 {strides = array<i32>} : memref<2x16xf32, #tpu.memory_space<vmem>>, vector<2x16xf32>,
    } else {
    }
    return
  }
  func.func @transform_0(%arg0: i32, %arg1: i32) -> (i32, i32, i32, i32) {
    %c4_i32 = arith.constant 4 : i32
    %c0_i32 = arith.constant 0 : i32
    %c0_i32_0 = arith.constant 0 : i32
    return %arg0, %c4_i32, %arg1, %c0_i32 : i32, i32, i32, i32
  }
  func.func @transform_1(%arg0: i32, %arg1: i32) -> (i32, i32) {
    %c0_i32 = arith.constant 0 : i32
    %c0_i32_0 = arith.constant 0 : i32
    %c0_i32_1 = arith.constant 0 : i32
    return %c0_i32, %c0_i32_0 : i32, i32
  }
  func.func @transform_2(%arg0: i32, %arg1: i32) -> (i32, i32) {
    %c0_i32 = arith.constant 0 : i32
    %c0_i32_0 = arith.constant 0 : i32
    %c0_i32_1 = arith.constant 0 : i32
    return %c0_i32, %c0_i32_0 : i32, i32
  }
  func.func @transform_3(%arg0: i32, %arg1: i32) -> (i32, i32) {
    %c0_i32 = arith.constant 0 : i32
    %c0_i32_0 = arith.constant 0 : i32
    return %arg0, %c0_i32 : i32, i32
  }
}

</mosaic_0001>

<llo_original>
// kernel: tpu_custom_call.1
$region0: #{tpu_custom_call.1}
  #allocation0 [shape = 'u32[]', space=smem, size = 0x4, offset = 0x4, fixed_abs, tag = 'smem constant byte address 0x4 - core index']
  #allocation1 [shape = 'u32[72,128]{1,0:T(1,128)}', space=vmem, size = 0x9000, scoped, tag = 'internal scratch']
  #allocation2 [shape = 'f32[2,32]{1,0:T(2,128)}', space=vmem, size = 0x400, scoped, tag = 'scratch operand']
  #allocation3 [shape = 'f32[2,32]{1,0:T(2,128)}', space=vmem, size = 0x400, scoped, tag = 'scratch operand']
  %s0 = inlined_call_operand.vmem [shape: f32[2,5,8,32], index: 0, kind: input, shape index: {}]
  %s1 = inlined_call_operand.vmem [shape: f32[64,16], index: 1, kind: input, shape index: {}]
  %s2 = inlined_call_operand.vmem [shape: f32[1,16], index: 2, kind: input, shape index: {}]
  %s3 = inlined_call_operand.hbm [shape: f32[2,16], index: 3, kind: output, shape index: {}]
  %s4 = sld [smem:[#allocation0]]
  $region68: #{tpu_custom_call.1} parent=0
    _
  %s6 = ssub.s32 1, %s4
  %s7 = scalar_select 0, %s6, %s4
  $region1: #{tpu_custom_call.1} parent=0
    #allocation4 [shape = 'u8[8192]{0}', space=vmem, size = 0x2000, scoped, tag = 'input window, operand 0, single buffered']
    #allocation5 [shape = 'u8[1024]{0}', space=vmem, size = 0x400, scoped, tag = 'output window, operand 0, single buffered']
    #allocation6 [shape = 's32[1]{0}', space=sflag, size = 0x4, scoped, tag = 'scoped memory for tpu_custom_call.1']
    %8 = vsyncpa [#allocation6], 0
    // Predicated region
    $region2: #{tpu_custom_call.1} parent=1 // pred_check
      _
    $region3: #{tpu_custom_call.1} parent=1 // pred_check_branch
      %10 = sbr.rel (0) target = $region5
    $region4: #{tpu_custom_call.1} parent=1 // pred_region
      %s11 = scalar_lea.vmem %s0, 32
      // Predicated region
      $region6: #{tpu_custom_call.1} parent=4 // pred_check
        _
      $region7: #{tpu_custom_call.1} parent=4 // pred_check_branch
        %13 = sbr.rel (0) target = $region9
      $region8: #{tpu_custom_call.1} parent=4 // pred_region
        // Predicated region
        $region10: #{tpu_custom_call.1} parent=8 // pred_check
          _
        $region11: #{tpu_custom_call.1} parent=8 // pred_check_branch
          %15 = sbr.rel (0) target = $region13
        $region12: #{tpu_custom_call.1} parent=8 // pred_region
          // Predicated region
          $region25: #{tpu_custom_call.1} parent=12 // pred_check
            _
          $region26: #{tpu_custom_call.1} parent=12 // pred_check_branch
            %33 = sbr.rel (0) target = $region28
          $region27: #{tpu_custom_call.1} parent=12 // pred_region
            loop: start=0, step=1, limit=1
            $region29: #{tpu_custom_call.1} parent=27 // loop_pre_header
              _
            $region30: #{tpu_custom_call.1} parent=27 // loop_header
              %s35 = sphi 0, %s39
              %p36 = scmp.ge.s32.totalorder %s35, 1
              %s40 = sphi %s11, %s11
              %s41 = sphi [#allocation4], [#allocation4]
            $region31: #{tpu_custom_call.1} parent=27 // loop_header_branch
              %38 = sbr.rel (%p36) target = $region35
            $region32: #{tpu_custom_call.1} parent=27 // loop_body
              %v42 = vld [vmem:[%s40] sm:$0xff]
              %43 = vst [vmem:[%s41] sm:$0xff] %v42
              %v44 = vld [vmem:[%s40 + $0x28] sm:$0xff]
              %45 = vst [vmem:[%s41 + $0x8] sm:$0xff] %v44
            $region33: #{tpu_custom_call.1} parent=27 // loop_footer
              %s39 = sadd.s32 1, %s35
            $region34: #{tpu_custom_call.1} parent=27 // loop_footer_branch
              %34 = sbr.rel target = $region30
            $region35: #{tpu_custom_call.1} parent=27 // loop_exit
              _
          $region28: #{tpu_custom_call.1} parent=12 // pred_fallthru
            _
          // Predicated region
          $region36: #{tpu_custom_call.1} parent=12 // pred_check
            _
          $region37: #{tpu_custom_call.1} parent=12 // pred_check_branch
            %47 = sbr.rel target = $region39
          $region38: #{tpu_custom_call.1} parent=12 // pred_region
            _
          $region39: #{tpu_custom_call.1} parent=12 // pred_fallthru
            _
        $region13: #{tpu_custom_call.1} parent=8 // pred_fallthru
          _
        // Predicated region
        $region14: #{tpu_custom_call.1} parent=8 // pred_check
          _
        $region15: #{tpu_custom_call.1} parent=8 // pred_check_branch
          %17 = sbr.rel target = $region17
        $region16: #{tpu_custom_call.1} parent=8 // pred_region
          %s19 = ssub.s32 256, 1
          loop: start=0, step=1, limit=1
          $region18: #{tpu_custom_call.1} parent=16 // loop_pre_header
            _
          $region19: #{tpu_custom_call.1} parent=16 // loop_header
            %s21 = sphi 0, %s25
            %p22 = scmp.ge.s32.totalorder %s21, 1
            %s26 = sphi %s11, %s11
            %s27 = sphi [#allocation4], [#allocation4]
          $region20: #{tpu_custom_call.1} parent=16 // loop_header_branch
            %24 = sbr.rel (%p22) target = $region24
          $region21: #{tpu_custom_call.1} parent=16 // loop_body
            %v28 = vld [vmem:[%s26] sm:%s19]
            %29 = vst [vmem:[%s27] sm:%s19] %v28
            %v30 = vld [vmem:[%s26 + $0x28] sm:%s19]
            %31 = vst [vmem:[%s27 + $0x8] sm:%s19] %v30
          $region22: #{tpu_custom_call.1} parent=16 // loop_footer
            %s25 = sadd.s32 1, %s21
          $region23: #{tpu_custom_call.1} parent=16 // loop_footer_branch
            %20 = sbr.rel target = $region19
          $region24: #{tpu_custom_call.1} parent=16 // loop_exit
            _
        $region17: #{tpu_custom_call.1} parent=8 // pred_fallthru
          _
      $region9: #{tpu_custom_call.1} parent=4 // pred_fallthru
        _
      %48 = vnop
    $region5: #{tpu_custom_call.1} parent=1 // pred_fallthru
      _
    // Predicated region
    $region40: #{tpu_custom_call.1} parent=1 // pred_check
      _
    $region41: #{tpu_custom_call.1} parent=1 // pred_check_branch
      %50 = sbr.rel (0) target = $region43
    $region42: #{tpu_custom_call.1} parent=1 // pred_region
      _
    $region43: #{tpu_custom_call.1} parent=1 // pred_fallthru
      _
    // Predicated region
    $region44: #{tpu_custom_call.1} parent=1 // pred_check
      _
    $region45: #{tpu_custom_call.1} parent=1 // pred_check_branch
      %52 = sbr.rel (0) target = $region47
    $region46: #{tpu_custom_call.1} parent=1 // pred_region
      _
    $region47: #{tpu_custom_call.1} parent=1 // pred_fallthru
      _
    // Predicated region
    $region48: #{tpu_custom_call.1} parent=1 // pred_check
      _
    $region49: #{tpu_custom_call.1} parent=1 // pred_check_branch
      %54 = sbr.rel (0) target = $region51
    $region50: #{tpu_custom_call.1} parent=1 // pred_region
      _
    $region51: #{tpu_custom_call.1} parent=1 // pred_fallthru
      _
    %p55 = scmp.eq.s32.totalorder 0, 0
    // Predicated region
    $region52: #{tpu_custom_call.1} parent=1 // pred_check
      %p56 = pneg %p55
    $region53: #{tpu_custom_call.1} parent=1 // pred_check_branch
      %58 = sbr.rel (%p56) target = $region55
    $region54: #{tpu_custom_call.1} parent=1 // pred_region
      %vm59 = vcmask 254976
      %60 = vst.msk [vmem:[#allocation2] sm:$0x3] %vm59, 0.0
      %61 = vst.msk [vmem:[#allocation3] sm:$0x3] %vm59, 0.0
    $region55: #{tpu_custom_call.1} parent=1 // pred_fallthru
      _
    %v62 = vld [vmem:[#allocation4] sm:$0xff]
    %v63 = vld [vmem:[#allocation4 + $0x8] sm:$0xff]
    %v64 = vld [vmem:[#allocation2] sm:$0x3]
    %vm65 = vcmask 261120
    %v66 = vsel %vm65, %v62, 0.0
    %v67 = vrot.slane %v66, 4
    %v68 = vadd.f32 %v66, %v67
    %v69 = vrot.slane %v68, 2
    %v70 = vadd.f32 %v68, %v69
    %v71 = vrot.slane %v70, 1
    %v72 = vadd.f32 %v70, %v71
    %v73 = vsel %vm65, %v63, 0.0
    %v74 = vrot.slane %v73, 4
    %v75 = vadd.f32 %v73, %v74
    %v76 = vrot.slane %v75, 2
    %v77 = vadd.f32 %v75, %v76
    %v78 = vrot.slane %v77, 1
    %v79 = vadd.f32 %v77, %v78
    %vm82 = vcmask 1041409
    %v83 = vsel %vm82, %v79, %v72
    %v85 = vadd.f32 %v64, %v83
    %vm86 = vcmask 254976
    %87 = vst.msk [vmem:[#allocation2] sm:$0x3] %vm86, %v85
    %v88 = vld [vmem:[#allocation3] sm:$0x3]
    %v89 = vmul.f32 %v62, %v62
    %v90 = vmul.f32 %v63, %v63
    %v91 = vsel %vm65, %v89, 0.0
    %v92 = vrot.slane %v91, 4
    %v93 = vadd.f32 %v91, %v92
    %v94 = vrot.slane %v93, 2
    %v95 = vadd.f32 %v93, %v94
    %v96 = vrot.slane %v95, 1
    %v97 = vadd.f32 %v95, %v96
    %v98 = vsel %vm65, %v90, 0.0
    %v99 = vrot.slane %v98, 4
    %v100 = vadd.f32 %v98, %v99
    %v101 = vrot.slane %v100, 2
    %v102 = vadd.f32 %v100, %v101
    %v103 = vrot.slane %v102, 1
    %v104 = vadd.f32 %v102, %v103
    %v107 = vsel %vm82, %v104, %v97
    %v109 = vadd.f32 %v88, %v107
    %110 = vst.msk [vmem:[#allocation3] sm:$0x3] %vm86, %v109
    // Predicated region
    $region56: #{tpu_custom_call.1} parent=1 // pred_check
      %p111 = pneg %p55
    $region57: #{tpu_custom_call.1} parent=1 // pred_check_branch
      %113 = sbr.rel (%p111) target = $region59
    $region58: #{tpu_custom_call.1} parent=1 // pred_region
      %v114 = vld [vmem:[#allocation2] sm:$0x3]
      %v115 = vmul.f32 %v114, 0.125
      %v116 = vld [vmem:[#allocation3] sm:$0x3]
      %v117 = vmul.f32 %v114, %v115
      %v118 = vsub.f32 %v116, %v117
      %v119 = vmul.f32 %v118, 0.14285715
      %v120 = vmax.f32 %v119, 0.0
      %v121 = vrsqrt.pop %v120
      %v122 = vmul.f32 %v121, %v120
      %v123 = vmul.f32 %v122, %v121
      %v124 = vmul.f32 0.5, %v123
      %v125 = vsub.f32 1.5, %v124
      %v126 = vmul.f32 %v121, %v125
      %v127 = vmul.f32 %v120, %v126
      %vm128 = vcmp.eq.f32.partialorder %v120, inf
      %v129 = vsel %vm128, %v120, %v127
      %vm130 = vcmp.eq.f32.partialorder %v120, 0.0
      %v131 = vand.u32 %v120, 2147483648
      %v132 = vsel %vm130, %v131, %v129
      %v133 = vld [vmem:[%s1] sm:$0xff]
      %v134 = vld [vmem:[%s1 + $0x8] sm:$0xff]
      %v135 = vld [vmem:[%s1 + $0x10] sm:$0xff]
      %v136 = vld [vmem:[%s1 + $0x18] sm:$0xff]
      %v137 = vld [vmem:[%s1 + $0x20] sm:$0xff]
      %v138 = vld [vmem:[%s1 + $0x28] sm:$0xff]
      %v139 = vld [vmem:[%s1 + $0x30] sm:$0xff]
      %v140 = vld [vmem:[%s1 + $0x38] sm:$0xff]
      %v142 = vsel %vm65, %v132, 0
      %144 = vmatpush.msra.mxu0 0.0
      %145 = vmatpush.msra.mxu0 0.0
      %146 = vmatpush.msra.mxu0 0.0
      %147 = vmatpush.msra.mxu0 0.0
      %148 = vmatpush.msra.mxu0 0.0
      %149 = vmatpush.msra.mxu0 0.0
      %150 = vmatpush.msra.mxu0 0.0
      %151 = vmatpush.msra.mxu0 0.0
      %152 = vmatpush.msra.mxu0 0.0
      %153 = vmatpush.msra.mxu0 0.0
      %154 = vmatpush.msra.mxu0 0.0
      %155 = vmatpush.msra.mxu0 0.0
      %156 = vmatpush.msra.mxu0 %v140
      %157 = vmatpush.msra.mxu0 %v139
      %158 = vmatpush.msra.mxu0 %v138
      %159 = vmatpush.msra.mxu0 %v137
      %160 = vmatmul.f32.gmra.mxu0 %v142
      %v161 = vpop.f32.mrf.mxu0
      %v162 = vadd.f32 0.0, %v161
      %163 = vdwg.mxu0
      %v165 = vsel %vm65, %v115, 0
      %167 = vmatpush.msra.mxu0 0.0
      %168 = vmatpush.msra.mxu0 0.0
      %169 = vmatpush.msra.mxu0 0.0
      %170 = vmatpush.msra.mxu0 0.0
      %171 = vmatpush.msra.mxu0 0.0
      %172 = vmatpush.msra.mxu0 0.0
      %173 = vmatpush.msra.mxu0 0.0
      %174 = vmatpush.msra.mxu0 0.0
      %175 = vmatpush.msra.mxu0 0.0
      %176 = vmatpush.msra.mxu0 0.0
      %177 = vmatpush.msra.mxu0 0.0
      %178 = vmatpush.msra.mxu0 0.0
      %179 = vmatpush.msra.mxu0 %v136
      %180 = vmatpush.msra.mxu0 %v135
      %181 = vmatpush.msra.mxu0 %v134
      %182 = vmatpush.msra.mxu0 %v133
      %183 = vmatmul.f32.gmra.mxu0 %v165
      %v184 = vpop.f32.mrf.mxu0
      %v185 = vadd.f32 %v162, %v184
      %186 = vdwg.mxu0
      %v187 = vld [vmem:[%s2] sm:$0x1]
      %v189 = vperm.slane %v187, 0
      %v191 = vadd.f32 %v185, %v189
      %vm192 = vcmask 123904
      %193 = vst.msk [vmem:[#allocation5] sm:$0x3] %vm192, %v191
    $region59: #{tpu_custom_call.1} parent=1 // pred_fallthru
      _
    // Predicated region
    $region60: #{tpu_custom_call.1} parent=1 // pred_check
      _
    $region61: #{tpu_custom_call.1} parent=1 // pred_check_branch
      %195 = sbr.rel (0) target = $region63
    $region62: #{tpu_custom_call.1} parent=1 // pred_region
      %197 = vsyncadd [#allocation6], 0
      %s199 = sshll.u32 [#allocation5], 4
      %s200 = int_to_ptr.vmem [resolvable:$true] %s199
      %s201 = sshll.u32 %s3, 4
      %s202 = int_to_ptr.hbm [resolvable:$true] %s201
      %204 = dma.vmem_to_hbm [thread:$0]  %s200, 32, %s202, [#allocation6]
    $region63: #{tpu_custom_call.1} parent=1 // pred_fallthru
      _
    // Predicated region
    $region64: #{tpu_custom_call.1} parent=1 // pred_check
      _
    $region65: #{tpu_custom_call.1} parent=1 // pred_check_branch
      %206 = sbr.rel (0) target = $region67
    $region66: #{tpu_custom_call.1} parent=1 // pred_region
      %208 = dma.done [#allocation6], 32
    $region67: #{tpu_custom_call.1} parent=1 // pred_fallthru
      _
    %209 = vsyncpa [#allocation6], 1

</llo_original>
